<compile_context>
chip_gen: v7x
topology: tpu7x:2x2x1
jax: 0.10.0
libtpu: 0.0.40
codegen_flags: <defaults>
</compile_context>

<pallas_src>
import functools

import jax
import jax.numpy as jnp
from jax import lax
from jax.experimental import pallas as pl
from jax.experimental.pallas import tpu as pltpu

# Sobel filter used by the PyTorch module (conv_y uses its transpose).
SOBEL_X = ((1.0, 0.0, -1.0),
           (2.0, 0.0, -2.0),
           (1.0, 0.0, -1.0))
SOBEL_Y = tuple(tuple(SOBEL_X[j][i] for j in range(3)) for i in range(3))


def _axpy(acc, c, v):
    """acc + c*v with the trivial coefficients folded away at trace time."""
    if c == 0.0:
        return acc
    if c == 1.0:
        return acc + v
    if c == -1.0:
        return acc - v
    return acc + c * v


def _sobelxy_kernel(x_ref, o_ref, *, H, W):
    """Fused |sobel_x| + |sobel_y| on one (1, CB, H, W) channel-major tile.

    The 3x3 depthwise convs use the same filter on every channel, so they are
    pure VPU shifted adds applied to the whole (CB, H, W) tile at once.
    """
    xv = x_ref[0].astype(jnp.float32)                       # (CB, H, W)
    CB = xv.shape[0]

    # In-kernel 'same' zero padding (VMEM only, no extra HBM pass).
    zrow = jnp.zeros((CB, 1, W), jnp.float32)
    xh = jnp.concatenate([zrow, xv, zrow], axis=1)          # (CB, H+2, W)
    zcol = jnp.zeros((CB, H + 2, 1), jnp.float32)
    xp = jnp.concatenate([zcol, xh, zcol], axis=2)          # (CB, H+2, W+2)

    gx = jnp.zeros((CB, H, W), jnp.float32)
    gy = jnp.zeros((CB, H, W), jnp.float32)
    for ky in range(3):
        for kx in range(3):
            cx = SOBEL_X[ky][kx]
            cy = SOBEL_Y[ky][kx]
            if cx == 0.0 and cy == 0.0:     # center tap: zero in both filters
                continue
            patch = xp[:, ky:ky + H, kx:kx + W]             # (CB, H, W)
            gx = _axpy(gx, cx, patch)
            gy = _axpy(gy, cy, patch)

    o_ref[0] = (jnp.abs(gx) + jnp.abs(gy)).astype(o_ref.dtype)


def _pick_c_block(N, C, H, W, budget_bytes=8 << 20):
    """Largest channel-block (divisor of C) whose working set fits the budget,
    keeping at least 2 grid steps on a parallel axis when batch == 1 (v7x)."""
    best = 1
    for cb in range(1, C + 1):
        if C % cb:
            continue
        # double-buffered in + out tiles, plus in-kernel padded temporaries
        footprint = cb * 4 * (2 * H * W + 2 * H * W + 3 * (H + 2) * (W + 2))
        if footprint <= budget_bytes:
            best = cb
    if N == 1 and C >= 2 and C // best < 2:
        for cb in range(C - 1, 0, -1):
            if C % cb == 0 and C // cb >= 2:
                best = cb
                break
    return best


def sobelxy(x, *, c_block=None):
    """Sobelxy forward: x (N, C, H, W) float -> (N, C, H, W)."""
    N, C, H, W = x.shape
    cb = c_block if c_block is not None else _pick_c_block(N, C, H, W)
    assert C % cb == 0, (C, cb)

    kernel = functools.partial(_sobelxy_kernel, H=H, W=W)
    return pl.pallas_call(
        kernel,
        out_shape=jax.ShapeDtypeStruct((N, C, H, W), x.dtype),
        grid=(N, C // cb),
        in_specs=[pl.BlockSpec((1, cb, H, W), lambda n, c: (n, c, 0, 0))],
        out_specs=pl.BlockSpec((1, cb, H, W), lambda n, c: (n, c, 0, 0)),
        compiler_params=pltpu.CompilerParams(
            dimension_semantics=("parallel", "parallel"),
            vmem_limit_bytes=32 * 1024 * 1024,
        ),
    )(x)


if __name__ == "__main__":
    key = jax.random.PRNGKey(0)
    N, C, H, W = 2, 4, 16, 16
    x = jax.random.uniform(key, (N, C, H, W), jnp.float32)

    out = jax.jit(sobelxy)(x)
    out = jax.block_until_ready(out)

    # Pure-JAX reference: depthwise cross-correlation, zero 'same' padding.
    sob = jnp.array(SOBEL_X, jnp.float32)
    wx = jnp.broadcast_to(sob, (C, 1, 3, 3))
    wy = jnp.broadcast_to(sob.T, (C, 1, 3, 3))
    dn = ("NCHW", "OIHW", "NCHW")
    cx = lax.conv_general_dilated(x, wx, (1, 1), ((1, 1), (1, 1)),
                                  dimension_numbers=dn, feature_group_count=C,
                                  precision=lax.Precision.HIGHEST)
    cy = lax.conv_general_dilated(x, wy, (1, 1), ((1, 1), (1, 1)),
                                  dimension_numbers=dn, feature_group_count=C,
                                  precision=lax.Precision.HIGHEST)
    ref = jnp.abs(cx) + jnp.abs(cy)

    assert out.shape == (N, C, H, W), out.shape
    assert bool(jnp.all(jnp.isfinite(out)))
    assert bool(jnp.allclose(out, ref, atol=1e-4, rtol=1e-4)), \
        float(jnp.max(jnp.abs(out - ref)))
    print("KERNEL_OK")
</pallas_src>

<mosaic_0001>
module attributes {stable_mosaic.version = 11 : i64} {
  func.func @_sobelxy_kernel(%arg0: i32, %arg1: i32, %arg2: memref<1x4x16x16xf32, #tpu.memory_space<vmem>>, %arg3: memref<1x4x16x16xf32, #tpu.memory_space<vmem>>) attributes {dimension_semantics = [#tpu.dimension_semantics<parallel>, #tpu.dimension_semantics<parallel>], iteration_bounds = array<i64: 2, 1>, scalar_prefetch = 0 : i64, scratch_operands = 0 : i64, tpu.core_type = #tpu.core_type<tc>, window_params = [{transform_indices = @transform_0, window_bounds = array<i64: 1, 4, 16, 16>}, {transform_indices = @transform_1, window_bounds = array<i64: 1, 4, 16, 16>}]} {
    %c0 = arith.constant 0 : index
    %c0_0 = arith.constant 0 : index
    %c0_1 = arith.constant 0 : index
    %c0_2 = arith.constant 0 : index
    %0 = vector.load %arg2[%c0, %c0_0, %c0_1, %c0_2] : memref<1x4x16x16xf32, #tpu.memory_space<vmem>>, vector<1x4x16x16xf32>
    %1 = vector.shape_cast %0 : vector<1x4x16x16xf32> to vector<4x16x16xf32>
    %cst = arith.constant 0.000000e+00 : f32
    %2 = vector.broadcast %cst : f32 to vector<4x1x16xf32>
    %3 = tpu.concatenate %2, %1, %2 in 1 : vector<4x1x16xf32>, vector<4x16x16xf32>, vector<4x1x16xf32> -> vector<4x18x16xf32>
    %cst_3 = arith.constant 0.000000e+00 : f32
    %4 = vector.broadcast %cst_3 : f32 to vector<4x18x1xf32>
    %5 = tpu.concatenate %4, %3, %4 in 2 : vector<4x18x1xf32>, vector<4x18x16xf32>, vector<4x18x1xf32> -> vector<4x18x18xf32>
    %cst_4 = arith.constant 0.000000e+00 : f32
    %6 = vector.broadcast %cst_4 : f32 to vector<4x16x16xf32>
    %cst_5 = arith.constant 0.000000e+00 : f32
    %7 = vector.broadcast %cst_5 : f32 to vector<4x16x16xf32>
    %8 = vector.extract_strided_slice %5 {offsets = [0, 0, 0], sizes = [4, 16, 16], strides = [1, 1, 1]} : vector<4x18x18xf32> to vector<4x16x16xf32>
    %9 = arith.addf %6, %8 : vector<4x16x16xf32>
    %10 = arith.addf %7, %8 : vector<4x16x16xf32>
    %11 = vector.extract_strided_slice %5 {offsets = [0, 0, 1], sizes = [4, 16, 16], strides = [1, 1, 1]} : vector<4x18x18xf32> to vector<4x16x16xf32>
    %cst_6 = arith.constant 2.000000e+00 : f32
    %12 = vector.broadcast %cst_6 : f32 to vector<4x16x16xf32>
    %13 = arith.mulf %12, %11 : vector<4x16x16xf32>
    %14 = arith.addf %10, %13 : vector<4x16x16xf32>
    %15 = vector.extract_strided_slice %5 {offsets = [0, 0, 2], sizes = [4, 16, 16], strides = [1, 1, 1]} : vector<4x18x18xf32> to vector<4x16x16xf32>
    %16 = arith.subf %9, %15 : vector<4x16x16xf32>
    %17 = arith.addf %14, %15 : vector<4x16x16xf32>
    %18 = vector.extract_strided_slice %5 {offsets = [0, 1, 0], sizes = [4, 16, 16], strides = [1, 1, 1]} : vector<4x18x18xf32> to vector<4x16x16xf32>
    %cst_7 = arith.constant 2.000000e+00 : f32
    %19 = vector.broadcast %cst_7 : f32 to vector<4x16x16xf32>
    %20 = arith.mulf %19, %18 : vector<4x16x16xf32>
    %21 = arith.addf %16, %20 : vector<4x16x16xf32>
    %22 = vector.extract_strided_slice %5 {offsets = [0, 1, 2], sizes = [4, 16, 16], strides = [1, 1, 1]} : vector<4x18x18xf32> to vector<4x16x16xf32>
    %cst_8 = arith.constant -2.000000e+00 : f32
    %23 = vector.broadcast %cst_8 : f32 to vector<4x16x16xf32>
    %24 = arith.mulf %23, %22 : vector<4x16x16xf32>
    %25 = arith.addf %21, %24 : vector<4x16x16xf32>
    %26 = vector.extract_strided_slice %5 {offsets = [0, 2, 0], sizes = [4, 16, 16], strides = [1, 1, 1]} : vector<4x18x18xf32> to vector<4x16x16xf32>
    %27 = arith.addf %25, %26 : vector<4x16x16xf32>
    %28 = arith.subf %17, %26 : vector<4x16x16xf32>
    %29 = vector.extract_strided_slice %5 {offsets = [0, 2, 1], sizes = [4, 16, 16], strides = [1, 1, 1]} : vector<4x18x18xf32> to vector<4x16x16xf32>
    %cst_9 = arith.constant -2.000000e+00 : f32
    %30 = vector.broadcast %cst_9 : f32 to vector<4x16x16xf32>
    %31 = arith.mulf %30, %29 : vector<4x16x16xf32>
    %32 = arith.addf %28, %31 : vector<4x16x16xf32>
    %33 = vector.extract_strided_slice %5 {offsets = [0, 2, 2], sizes = [4, 16, 16], strides = [1, 1, 1]} : vector<4x18x18xf32> to vector<4x16x16xf32>
    %34 = arith.subf %27, %33 : vector<4x16x16xf32>
    %35 = arith.subf %32, %33 : vector<4x16x16xf32>
    %36 = math.absf %34 : vector<4x16x16xf32>
    %37 = math.absf %35 : vector<4x16x16xf32>
    %38 = arith.addf %36, %37 : vector<4x16x16xf32>
    %c0_10 = arith.constant 0 : index
    %c0_11 = arith.constant 0 : index
    %c0_12 = arith.constant 0 : index
    %c0_13 = arith.constant 0 : index
    %39 = vector.load %arg3[%c0_10, %c0_11, %c0_12, %c0_13] : memref<1x4x16x16xf32, #tpu.memory_space<vmem>>, vector<1x4x16x16xf32>
    %40 = vector.shape_cast %39 : vector<1x4x16x16xf32> to vector<4x16x16xf32>
    %41 = vector.shape_cast %38 : vector<4x16x16xf32> to vector<1x4x16x16xf32>
    tpu.vector_store %arg3[%c0_10, %c0_11, %c0_12, %c0_13], %41 {strides = array<i32>} : memref<1x4x16x16xf32, #tpu.memory_space<vmem>>, vector<1x4x16x16xf32>,
    return
  }
  func.func @transform_0(%arg0: i32, %arg1: i32) -> (i32, i32, i32, i32) {
    %c0_i32 = arith.constant 0 : i32
    %c0_i32_0 = arith.constant 0 : i32
    %c0_i32_1 = arith.constant 0 : i32
    return %arg0, %arg1, %c0_i32, %c0_i32_0 : i32, i32, i32, i32
  }
  func.func @transform_1(%arg0: i32, %arg1: i32) -> (i32, i32, i32, i32) {
    %c0_i32 = arith.constant 0 : i32
    %c0_i32_0 = arith.constant 0 : i32
    %c0_i32_1 = arith.constant 0 : i32
    return %arg0, %arg1, %c0_i32, %c0_i32_0 : i32, i32, i32, i32
  }
}

</mosaic_0001>

<llo_original>
// kernel: sobelxy.1
$region0: #{sobelxy.1}
  #allocation0 [shape = 'u32[]', space=smem, size = 0x4, offset = 0x4, fixed_abs, tag = 'smem constant byte address 0x4 - core index']
  #allocation1 [shape = 'u32[144,128]{1,0:T(1,128)}', space=vmem, size = 0x12000, scoped, tag = 'internal scratch']
  %s0 = inlined_call_operand.hbm [shape: f32[2,4,16,16], index: 0, kind: input, shape index: {}]
  %s1 = inlined_call_operand.hbm [shape: f32[2,4,16,16], index: 1, kind: output, shape index: {}]
  %s2 = sld [smem:[#allocation0]]
  $region41: #{sobelxy.1} parent=0
    _
  %s4 = ssub.s32 1, %s2
  %s5 = scalar_select 0, %s4, %s2
  $region1: #{sobelxy.1} parent=0
    #allocation2 [shape = 'u8[65536]{0}', space=vmem, size = 0x10000, scoped, tag = 'input window, operand 0']
    #allocation3 [shape = 's32[2]{0}', space=sflag, size = 0x8, scoped, tag = 'scoped memory for sobelxy.1']
    #allocation4 [shape = 's32[2]{0}', space=sflag, size = 0x8, scoped, tag = 'scoped memory for sobelxy.1']
    #allocation5 [shape = 'u8[65536]{0}', space=vmem, size = 0x10000, scoped, tag = 'output window, operand 0']
    %6 = vsyncpa [#allocation3], 0
    %s7 = scalar_lea.sflag [#allocation3], 1
    %8 = vsyncpa %s7, 0
    %9 = vsyncpa [#allocation4], 0
    %s10 = scalar_lea.sflag [#allocation4], 1
    %11 = vsyncpa %s10, 0
    loop: start=0, step=1, limit=4
    $region2: #{sobelxy.1} parent=1 // loop_pre_header
      _
    $region3: #{sobelxy.1} parent=1 // loop_header
      %s13 = sphi 0, %s17
      %p14 = scmp.ge.s32.totalorder %s13, 4
      %s20 = sphi 0, %s32
      %s21 = sphi 0, %s28
      %s22 = sphi 0, %s20
      %s23 = sphi 0, %s21
      %s24 = sphi 0, %s22
      %s25 = sphi 0, %s23
      %s37 = sphi 0, %s39
      %s40 = sphi 0, %s37
      %s41 = sphi 0, %s40
      %s57 = sphi 0, %s41
      %s65 = sphi 0, %s67
      %s68 = sphi 0, %s65
      %s69 = sphi 0, %s68
      %s85 = sphi 0, %s69
    $region4: #{sobelxy.1} parent=1 // loop_header_branch
      %16 = sbr.rel (%p14) target = $region8
    $region5: #{sobelxy.1} parent=1 // loop_body
      %s18 = ssub.s32 %s13, 1
      %s19 = ssub.s32 %s13, 2
      %s26 = sadd.s32 1, %s21
      %p27 = scmp.ge.s32.totalorder %s26, 1
      %s28 = scalar_select %p27, 0, %s26
      %s29 = sadd.s32 1, %s20
      %s30 = scalar_select %p27, %s29, %s20
      %p31 = scmp.ge.s32.totalorder %s30, 2
      %s32 = scalar_select %p31, 0, %s30
      %s33 = ssub.s32 %s20, %s32
      %s34 = ssub.s32 %s21, %s28
      %s35 = sor.u32 %s33, %s34
      %p36 = scmp.eq.s32.totalorder %s35, 0
      %s38 = sadd.s32 %s37, 1
      %s39 = scalar_select %p36, %s37, %s38
      %p42 = pneg %p36
      %p43 = scmp.eq.s32.totalorder %s13, 1
      %p44 = por %p42, %p43
      %p45 = scmp.ne.s32.totalorder %s37, %s40
      %p46 = scmp.eq.s32.totalorder %s13, 0
      %p47 = por %p45, %p46
      %p48 = scmp.ne.s32.totalorder %s37, %s40
      %p49 = scmp.eq.s32.totalorder %s18, 1
      %p50 = por %p48, %p49
      %p51 = scmp.ne.s32.totalorder %s40, %s41
      %p52 = scmp.eq.s32.totalorder %s18, 0
      %p53 = por %p51, %p52
      %p54 = scmp.ne.s32.totalorder %s40, %s41
      %p55 = scmp.eq.s32.totalorder %s19, 1
      %p56 = por %p54, %p55
      %p58 = scmp.ne.s32.totalorder %s41, %s57
      %p59 = scmp.eq.s32.totalorder %s19, 0
      %p60 = por %p58, %p59
      %s61 = ssub.s32 %s20, %s32
      %s62 = ssub.s32 %s21, %s28
      %s63 = sor.u32 %s61, %s62
      %p64 = scmp.eq.s32.totalorder %s63, 0
      %s66 = sadd.s32 %s65, 1
      %s67 = scalar_select %p64, %s65, %s66
      %p70 = pneg %p64
      %p71 = scmp.eq.s32.totalorder %s13, 1
      %p72 = por %p70, %p71
      %p73 = scmp.ne.s32.totalorder %s65, %s68
      %p74 = scmp.eq.s32.totalorder %s13, 0
      %p75 = por %p73, %p74
      %p76 = scmp.ne.s32.totalorder %s65, %s68
      %p77 = scmp.eq.s32.totalorder %s18, 1
      %p78 = por %p76, %p77
      %p79 = scmp.ne.s32.totalorder %s68, %s69
      %p80 = scmp.eq.s32.totalorder %s18, 0
      %p81 = por %p79, %p80
      %p82 = scmp.ne.s32.totalorder %s68, %s69
      %p83 = scmp.eq.s32.totalorder %s19, 1
      %p84 = por %p82, %p83
      %p86 = scmp.ne.s32.totalorder %s69, %s85
      %p87 = scmp.eq.s32.totalorder %s19, 0
      %p88 = por %p86, %p87
      %p89 = scmp.le.s32.totalorder 1, %s13
      %p90 = scmp.lt.s32.totalorder %s13, 3
      %p91 = pnand %p89, %p90
      %p92 = pneg %p91
      // Predicated region
      $region9: #{sobelxy.1} parent=5 // pred_check
        _
      $region10: #{sobelxy.1} parent=5 // pred_check_branch
        %94 = sbr.rel (%p91) target = $region12
      $region11: #{sobelxy.1} parent=5 // pred_region
        %s95 = ssub.s32 %s13, 1
      $region12: #{sobelxy.1} parent=5 // pred_fallthru
        _
      %p96 = scmp.lt.s32.totalorder %s13, 2
      // Predicated region
      $region13: #{sobelxy.1} parent=5 // pred_check
        %p97 = pneg %p96
      $region14: #{sobelxy.1} parent=5 // pred_check_branch
        %99 = sbr.rel (%p97) target = $region16
      $region15: #{sobelxy.1} parent=5 // pred_region
        // Predicated region
        $region17: #{sobelxy.1} parent=15 // pred_check
          %p100 = pneg %p47
        $region18: #{sobelxy.1} parent=15 // pred_check_branch
          %102 = sbr.rel (%p100) target = $region20
        $region19: #{sobelxy.1} parent=15 // pred_region
          %s103 = sand.u32 %s37, 1
          %s104 = scalar_lea.sflag [#allocation3], %s103
          %s105 = sand.u32 %s37, 1
          %s106 = smul.addr %s105, 64
          %s107 = scalar_lea.vmem [#allocation2], %s106
          %s108 = smul.u32 4, %s21
          %s110 = ssub.s32 1024, 1024
          %111 = vsyncadd %s104, %s110
          %s112 = smul.addr %s108, 2
          %s113 = smul.addr %s20, 8
          %s114 = sadd.s32 %s112, %s113
          %s115 = smul.addr %s114, 128
          %s116 = scalar_lea.hbm %s0, %s115
          %s117 = sshll.u32 %s107, 4
          %s118 = int_to_ptr.vmem [resolvable:$true] %s117
          %123 = dma.hbm_to_vmem [thread:$0]  %s116, 1024, %s118, %s104, 128, 128, 8
        $region20: #{sobelxy.1} parent=15 // pred_fallthru
          _
      $region16: #{sobelxy.1} parent=5 // pred_fallthru
        _
      %p124 = scmp.le.s32.totalorder 1, %s13
      %p125 = scmp.lt.s32.totalorder %s13, 3
      %p126 = pnand %p124, %p125
      %p127 = pneg %p126
      // Predicated region
      $region21: #{sobelxy.1} parent=5 // pred_check
        _
      $region22: #{sobelxy.1} parent=5 // pred_check_branch
        %129 = sbr.rel (%p126) target = $region24
      $region23: #{sobelxy.1} parent=5 // pred_region
        %s130 = ssub.s32 %s13, 1
        %s131 = sand.u32 %s40, 1
        %s132 = scalar_lea.sflag [#allocation3], %s131
        %s133 = sand.u32 %s40, 1
        %s134 = smul.addr %s133, 64
        %s135 = scalar_lea.vmem [#allocation2], %s134
        // Predicated region
        $region25: #{sobelxy.1} parent=23 // pred_check
          %p136 = pneg %p53
        $region26: #{sobelxy.1} parent=23 // pred_check_branch
          %138 = sbr.rel (%p136) target = $region28
        $region27: #{sobelxy.1} parent=23 // pred_region
          %139 = dma.done %s132, 1024
        $region28: #{sobelxy.1} parent=23 // pred_fallthru
          _
        %s140 = sand.u32 %s40, 1
        %s141 = scalar_lea.sflag [#allocation3], %s140
        %s142 = sand.u32 %s40, 1
        %s143 = smul.addr %s142, 64
        %s144 = scalar_lea.vmem [#allocation2], %s143
        %p145 = pneg %p53
        %p146 = pneg %p50
        %p147 = pneg %p81
        %p148 = pneg %p78
        %s149 = sand.u32 %s68, 1
        %s150 = scalar_lea.sflag [#allocation4], %s149
        %s151 = sand.u32 %s68, 1
        %s152 = smul.addr %s151, 64
        %s153 = scalar_lea.vmem [#allocation5], %s152
        %s154 = smul.u32 4, %s23
        %s155 = smul.u32 4, %s23
        %v156 = vld [vmem:[%s135] sm:$0xff]
        %v157 = vld [vmem:[%s135 + $0x8] sm:$0xff]
        %v158 = vld [vmem:[%s135 + $0x10] sm:$0xff]
        %v159 = vld [vmem:[%s135 + $0x18] sm:$0xff]
        %v160 = vld [vmem:[%s135 + $0x20] sm:$0xff]
        %v161 = vld [vmem:[%s135 + $0x28] sm:$0xff]
        %v162 = vld [vmem:[%s135 + $0x30] sm:$0xff]
        %v163 = vld [vmem:[%s135 + $0x38] sm:$0xff]
        %vm172 = vcmask 1040384
        %v173 = vrot.slane %v156, 7
        %v174 = vrot.slane %v157, 7
        %v175 = vsel %vm172, %v173, %v174
        %v176 = vrot.slane %v158, 7
        %v177 = vrot.slane %v159, 7
        %v178 = vsel %vm172, %v176, %v177
        %v179 = vrot.slane %v160, 7
        %v180 = vrot.slane %v161, 7
        %v181 = vsel %vm172, %v179, %v180
        %v182 = vrot.slane %v162, 7
        %v183 = vrot.slane %v163, 7
        %v184 = vsel %vm172, %v182, %v183
        %v193 = vsel %vm172, 0.0, %v173
        %v194 = vsel %vm172, 0.0, %v176
        %v195 = vsel %vm172, 0.0, %v179
        %v196 = vsel %vm172, 0.0, %v182
        %v197 = vsel %vm172, %v174, 0.0
        %v198 = vsel %vm172, %v177, 0.0
        %v199 = vsel %vm172, %v180, 0.0
        %v200 = vsel %vm172, %v183, 0.0
        %209 = vrot.lane.b32.xlu0 %v193, 1
        %v210 = vpop.permute.xlu0 %209
        %211 = vrot.lane.b32.xlu0 %v175, 1
        %v212 = vpop.permute.xlu0 %211
        %213 = vrot.lane.b32.xlu0 %v197, 1
        %v214 = vpop.permute.xlu0 %213
        %215 = vrot.lane.b32.xlu0 %v194, 1
        %v216 = vpop.permute.xlu0 %215
        %217 = vrot.lane.b32.xlu0 %v178, 1
        %v218 = vpop.permute.xlu0 %217
        %219 = vrot.lane.b32.xlu0 %v198, 1
        %v220 = vpop.permute.xlu0 %219
        %221 = vrot.lane.b32.xlu0 %v195, 1
        %v222 = vpop.permute.xlu0 %221
        %223 = vrot.lane.b32.xlu0 %v181, 1
        %v224 = vpop.permute.xlu0 %223
        %225 = vrot.lane.b32.xlu0 %v199, 1
        %v226 = vpop.permute.xlu0 %225
        %227 = vrot.lane.b32.xlu0 %v196, 1
        %v228 = vpop.permute.xlu0 %227
        %229 = vrot.lane.b32.xlu0 %v184, 1
        %v230 = vpop.permute.xlu0 %229
        %231 = vrot.lane.b32.xlu0 %v200, 1
        %v232 = vpop.permute.xlu0 %231
        %vm245 = vcmask 7168
        %v246 = vsel %vm245, 0.0, %v210
        %v247 = vsel %vm245, 0.0, %v212
        %v248 = vsel %vm245, 0.0, %v214
        %v249 = vsel %vm245, 0.0, %v216
        %v250 = vsel %vm245, 0.0, %v218
        %v251 = vsel %vm245, 0.0, %v220
        %v252 = vsel %vm245, 0.0, %v222
        %v253 = vsel %vm245, 0.0, %v224
        %v254 = vsel %vm245, 0.0, %v226
        %v255 = vsel %vm245, 0.0, %v228
        %v256 = vsel %vm245, 0.0, %v230
        %v257 = vsel %vm245, 0.0, %v232
        %vm258 = vcmask 138240
        %v259 = vsel %vm258, %v246, 0.0
        %v260 = vsel %vm258, %v247, 0.0
        %v261 = vsel %vm258, %v248, 0.0
        %v262 = vsel %vm258, %v249, 0.0
        %v263 = vsel %vm258, %v250, 0.0
        %v264 = vsel %vm258, %v251, 0.0
        %v265 = vsel %vm258, %v252, 0.0
        %v266 = vsel %vm258, %v253, 0.0
        %v267 = vsel %vm258, %v254, 0.0
        %v268 = vsel %vm258, %v255, 0.0
        %v269 = vsel %vm258, %v256, 0.0
        %v270 = vsel %vm258, %v257, 0.0
        %v271 = vadd.f32 %v259, 0.0
        %v272 = vadd.f32 %v260, 0.0
        %v273 = vadd.f32 %v262, 0.0
        %v274 = vadd.f32 %v263, 0.0
        %v275 = vadd.f32 %v265, 0.0
        %v276 = vadd.f32 %v266, 0.0
        %v277 = vadd.f32 %v268, 0.0
        %v278 = vadd.f32 %v269, 0.0
        %v279 = vmul.f32 %v259, 2.0
        %v280 = vmul.f32 %v260, 2.0
        %v281 = vmul.f32 %v262, 2.0
        %v282 = vmul.f32 %v263, 2.0
        %v283 = vmul.f32 %v265, 2.0
        %v284 = vmul.f32 %v266, 2.0
        %v285 = vmul.f32 %v268, 2.0
        %v286 = vmul.f32 %v269, 2.0
        %295 = vrot.lane.b32.xlu0 %v279, 127
        %v296 = vpop.permute.xlu0 %295
        %297 = vrot.lane.b32.xlu0 %v280, 127
        %v298 = vpop.permute.xlu0 %297
        %299 = vrot.lane.b32.xlu0 %v281, 127
        %v300 = vpop.permute.xlu0 %299
        %301 = vrot.lane.b32.xlu0 %v282, 127
        %v302 = vpop.permute.xlu0 %301
        %303 = vrot.lane.b32.xlu0 %v283, 127
        %v304 = vpop.permute.xlu0 %303
        %305 = vrot.lane.b32.xlu0 %v284, 127
        %v306 = vpop.permute.xlu0 %305
        %307 = vrot.lane.b32.xlu0 %v285, 127
        %v308 = vpop.permute.xlu0 %307
        %309 = vrot.lane.b32.xlu0 %v286, 127
        %v310 = vpop.permute.xlu0 %309
        %v319 = vadd.f32 %v271, %v296
        %v320 = vadd.f32 %v272, %v298
        %v321 = vadd.f32 %v273, %v300
        %v322 = vadd.f32 %v274, %v302
        %v323 = vadd.f32 %v275, %v304
        %v324 = vadd.f32 %v276, %v306
        %v325 = vadd.f32 %v277, %v308
        %v326 = vadd.f32 %v278, %v310
        %335 = vrot.lane.b32.xlu0 %v259, 126
        %v336 = vpop.permute.xlu0 %335
        %337 = vrot.lane.b32.xlu0 %v260, 126
        %v338 = vpop.permute.xlu0 %337
        %339 = vrot.lane.b32.xlu0 %v262, 126
        %v340 = vpop.permute.xlu0 %339
        %341 = vrot.lane.b32.xlu0 %v263, 126
        %v342 = vpop.permute.xlu0 %341
        %343 = vrot.lane.b32.xlu0 %v265, 126
        %v344 = vpop.permute.xlu0 %343
        %345 = vrot.lane.b32.xlu0 %v266, 126
        %v346 = vpop.permute.xlu0 %345
        %347 = vrot.lane.b32.xlu0 %v268, 126
        %v348 = vpop.permute.xlu0 %347
        %349 = vrot.lane.b32.xlu0 %v269, 126
        %v350 = vpop.permute.xlu0 %349
        %v359 = vsub.f32 %v271, %v336
        %v360 = vsub.f32 %v272, %v338
        %v361 = vsub.f32 %v273, %v340
        %v362 = vsub.f32 %v274, %v342
        %v363 = vsub.f32 %v275, %v344
        %v364 = vsub.f32 %v276, %v346
        %v365 = vsub.f32 %v277, %v348
        %v366 = vsub.f32 %v278, %v350
        %v367 = vadd.f32 %v319, %v336
        %v368 = vadd.f32 %v320, %v338
        %v369 = vadd.f32 %v321, %v340
        %v370 = vadd.f32 %v322, %v342
        %v371 = vadd.f32 %v323, %v344
        %v372 = vadd.f32 %v324, %v346
        %v373 = vadd.f32 %v325, %v348
        %v374 = vadd.f32 %v326, %v350
        %v375 = vmul.f32 %v261, 2.0
        %v376 = vmul.f32 %v264, 2.0
        %v377 = vmul.f32 %v267, 2.0
        %v378 = vmul.f32 %v270, 2.0
        %vm383 = vcmask 1046528
        %v384 = vrot.slane %v279, 1
        %v385 = vrot.slane %v280, 1
        %v386 = vsel %vm383, %v384, %v385
        %v387 = vrot.slane %v375, 1
        %v388 = vsel %vm383, %v385, %v387
        %v389 = vrot.slane %v281, 1
        %v390 = vrot.slane %v282, 1
        %v391 = vsel %vm383, %v389, %v390
        %v392 = vrot.slane %v376, 1
        %v393 = vsel %vm383, %v390, %v392
        %v394 = vrot.slane %v283, 1
        %v395 = vrot.slane %v284, 1
        %v396 = vsel %vm383, %v394, %v395
        %v397 = vrot.slane %v377, 1
        %v398 = vsel %vm383, %v395, %v397
        %v399 = vrot.slane %v285, 1
        %v400 = vrot.slane %v286, 1
        %v401 = vsel %vm383, %v399, %v400
        %v402 = vrot.slane %v378, 1
        %v403 = vsel %vm383, %v400, %v402
        %v412 = vadd.f32 %v359, %v386
        %v413 = vadd.f32 %v360, %v388
        %v414 = vadd.f32 %v361, %v391
        %v415 = vadd.f32 %v362, %v393
        %v416 = vadd.f32 %v363, %v396
        %v417 = vadd.f32 %v364, %v398
        %v418 = vadd.f32 %v365, %v401
        %v419 = vadd.f32 %v366, %v403
        %v420 = vmul.f32 %v259, -2.0
        %v421 = vmul.f32 %v260, -2.0
        %v422 = vmul.f32 %v261, -2.0
        %v423 = vmul.f32 %v262, -2.0
        %v424 = vmul.f32 %v263, -2.0
        %v425 = vmul.f32 %v264, -2.0
        %v426 = vmul.f32 %v265, -2.0
        %v427 = vmul.f32 %v266, -2.0
        %v428 = vmul.f32 %v267, -2.0
        %v429 = vmul.f32 %v268, -2.0
        %v430 = vmul.f32 %v269, -2.0
        %v431 = vmul.f32 %v270, -2.0
        %v444 = vrot.slane %v420, 1
        %v445 = vrot.slane %v421, 1
        %v446 = vsel %vm383, %v444, %v445
        %v447 = vrot.slane %v422, 1
        %v448 = vsel %vm383, %v445, %v447
        %v449 = vrot.slane %v423, 1
        %v450 = vrot.slane %v424, 1
        %v451 = vsel %vm383, %v449, %v450
        %v452 = vrot.slane %v425, 1
        %v453 = vsel %vm383, %v450, %v452
        %v454 = vrot.slane %v426, 1
        %v455 = vrot.slane %v427, 1
        %v456 = vsel %vm383, %v454, %v455
        %v457 = vrot.slane %v428, 1
        %v458 = vsel %vm383, %v455, %v457
        %v459 = vrot.slane %v429, 1
        %v460 = vrot.slane %v430, 1
        %v461 = vsel %vm383, %v459, %v460
        %v462 = vrot.slane %v431, 1
        %v463 = vsel %vm383, %v460, %v462
        %464 = vrot.lane.b32.xlu0 %v446, 126
        %v465 = vpop.permute.xlu0 %464
        %466 = vrot.lane.b32.xlu0 %v448, 126
        %v467 = vpop.permute.xlu0 %466
        %468 = vrot.lane.b32.xlu0 %v451, 126
        %v469 = vpop.permute.xlu0 %468
        %470 = vrot.lane.b32.xlu0 %v453, 126
        %v471 = vpop.permute.xlu0 %470
        %472 = vrot.lane.b32.xlu0 %v456, 126
        %v473 = vpop.permute.xlu0 %472
        %474 = vrot.lane.b32.xlu0 %v458, 126
        %v475 = vpop.permute.xlu0 %474
        %476 = vrot.lane.b32.xlu0 %v461, 126
        %v477 = vpop.permute.xlu0 %476
        %478 = vrot.lane.b32.xlu0 %v463, 126
        %v479 = vpop.permute.xlu0 %478
        %v488 = vadd.f32 %v412, %v465
        %v489 = vadd.f32 %v413, %v467
        %v490 = vadd.f32 %v414, %v469
        %v491 = vadd.f32 %v415, %v471
        %v492 = vadd.f32 %v416, %v473
        %v493 = vadd.f32 %v417, %v475
        %v494 = vadd.f32 %v418, %v477
        %v495 = vadd.f32 %v419, %v479
        %vm500 = vcmask 1045504
        %v501 = vrot.slane %v259, 2
        %v502 = vrot.slane %v260, 2
        %v503 = vsel %vm500, %v501, %v502
        %v504 = vrot.slane %v261, 2
        %v505 = vsel %vm500, %v502, %v504
        %v506 = vrot.slane %v262, 2
        %v507 = vrot.slane %v263, 2
        %v508 = vsel %vm500, %v506, %v507
        %v509 = vrot.slane %v264, 2
        %v510 = vsel %vm500, %v507, %v509
        %v511 = vrot.slane %v265, 2
        %v512 = vrot.slane %v266, 2
        %v513 = vsel %vm500, %v511, %v512
        %v514 = vrot.slane %v267, 2
        %v515 = vsel %vm500, %v512, %v514
        %v516 = vrot.slane %v268, 2
        %v517 = vrot.slane %v269, 2
        %v518 = vsel %vm500, %v516, %v517
        %v519 = vrot.slane %v270, 2
        %v520 = vsel %vm500, %v517, %v519
        %v529 = vadd.f32 %v488, %v503
        %v530 = vadd.f32 %v489, %v505
        %v531 = vadd.f32 %v490, %v508
        %v532 = vadd.f32 %v491, %v510
        %v533 = vadd.f32 %v492, %v513
        %v534 = vadd.f32 %v493, %v515
        %v535 = vadd.f32 %v494, %v518
        %v536 = vadd.f32 %v495, %v520
        %v537 = vsub.f32 %v367, %v503
        %v538 = vsub.f32 %v368, %v505
        %v539 = vsub.f32 %v369, %v508
        %v540 = vsub.f32 %v370, %v510
        %v541 = vsub.f32 %v371, %v513
        %v542 = vsub.f32 %v372, %v515
        %v543 = vsub.f32 %v373, %v518
        %v544 = vsub.f32 %v374, %v520
        %v545 = vrot.slane %v420, 2
        %v546 = vrot.slane %v421, 2
        %v547 = vsel %vm500, %v545, %v546
        %v548 = vrot.slane %v422, 2
        %v549 = vsel %vm500, %v546, %v548
        %v550 = vrot.slane %v423, 2
        %v551 = vrot.slane %v424, 2
        %v552 = vsel %vm500, %v550, %v551
        %v553 = vrot.slane %v425, 2
        %v554 = vsel %vm500, %v551, %v553
        %v555 = vrot.slane %v426, 2
        %v556 = vrot.slane %v427, 2
        %v557 = vsel %vm500, %v555, %v556
        %v558 = vrot.slane %v428, 2
        %v559 = vsel %vm500, %v556, %v558
        %v560 = vrot.slane %v429, 2
        %v561 = vrot.slane %v430, 2
        %v562 = vsel %vm500, %v560, %v561
        %v563 = vrot.slane %v431, 2
        %v564 = vsel %vm500, %v561, %v563
        %565 = vrot.lane.b32.xlu0 %v547, 127
        %v566 = vpop.permute.xlu0 %565
        %567 = vrot.lane.b32.xlu0 %v549, 127
        %v568 = vpop.permute.xlu0 %567
        %569 = vrot.lane.b32.xlu0 %v552, 127
        %v570 = vpop.permute.xlu0 %569
        %571 = vrot.lane.b32.xlu0 %v554, 127
        %v572 = vpop.permute.xlu0 %571
        %573 = vrot.lane.b32.xlu0 %v557, 127
        %v574 = vpop.permute.xlu0 %573
        %575 = vrot.lane.b32.xlu0 %v559, 127
        %v576 = vpop.permute.xlu0 %575
        %577 = vrot.lane.b32.xlu0 %v562, 127
        %v578 = vpop.permute.xlu0 %577
        %579 = vrot.lane.b32.xlu0 %v564, 127
        %v580 = vpop.permute.xlu0 %579
        %v589 = vadd.f32 %v537, %v566
        %v590 = vadd.f32 %v538, %v568
        %v591 = vadd.f32 %v539, %v570
        %v592 = vadd.f32 %v540, %v572
        %v593 = vadd.f32 %v541, %v574
        %v594 = vadd.f32 %v542, %v576
        %v595 = vadd.f32 %v543, %v578
        %v596 = vadd.f32 %v544, %v580
        %597 = vrot.lane.b32.xlu0 %v503, 126
        %v598 = vpop.permute.xlu0 %597
        %599 = vrot.lane.b32.xlu0 %v505, 126
        %v600 = vpop.permute.xlu0 %599
        %601 = vrot.lane.b32.xlu0 %v508, 126
        %v602 = vpop.permute.xlu0 %601
        %603 = vrot.lane.b32.xlu0 %v510, 126
        %v604 = vpop.permute.xlu0 %603
        %605 = vrot.lane.b32.xlu0 %v513, 126
        %v606 = vpop.permute.xlu0 %605
        %607 = vrot.lane.b32.xlu0 %v515, 126
        %v608 = vpop.permute.xlu0 %607
        %609 = vrot.lane.b32.xlu0 %v518, 126
        %v610 = vpop.permute.xlu0 %609
        %611 = vrot.lane.b32.xlu0 %v520, 126
        %v612 = vpop.permute.xlu0 %611
        %v621 = vsub.f32 %v529, %v598
        %v622 = vsub.f32 %v530, %v600
        %v623 = vsub.f32 %v531, %v602
        %v624 = vsub.f32 %v532, %v604
        %v625 = vsub.f32 %v533, %v606
        %v626 = vsub.f32 %v534, %v608
        %v627 = vsub.f32 %v535, %v610
        %v628 = vsub.f32 %v536, %v612
        %v629 = vsub.f32 %v589, %v598
        %v630 = vsub.f32 %v590, %v600
        %v631 = vsub.f32 %v591, %v602
        %v632 = vsub.f32 %v592, %v604
        %v633 = vsub.f32 %v593, %v606
        %v634 = vsub.f32 %v594, %v608
        %v635 = vsub.f32 %v595, %v610
        %v636 = vsub.f32 %v596, %v612
        %v637 = vand.u32 2147483647, %v621
        %v638 = vand.u32 2147483647, %v622
        %v639 = vand.u32 2147483647, %v623
        %v640 = vand.u32 2147483647, %v624
        %v641 = vand.u32 2147483647, %v625
        %v642 = vand.u32 2147483647, %v626
        %v643 = vand.u32 2147483647, %v627
        %v644 = vand.u32 2147483647, %v628
        %v645 = vand.u32 2147483647, %v629
        %v646 = vand.u32 2147483647, %v630
        %v647 = vand.u32 2147483647, %v631
        %v648 = vand.u32 2147483647, %v632
        %v649 = vand.u32 2147483647, %v633
        %v650 = vand.u32 2147483647, %v634
        %v651 = vand.u32 2147483647, %v635
        %v652 = vand.u32 2147483647, %v636
        %v653 = vadd.f32 %v637, %v645
        %v654 = vadd.f32 %v638, %v646
        %v655 = vadd.f32 %v639, %v647
        %v656 = vadd.f32 %v640, %v648
        %v657 = vadd.f32 %v641, %v649
        %v658 = vadd.f32 %v642, %v650
        %v659 = vadd.f32 %v643, %v651
        %v660 = vadd.f32 %v644, %v652
        %vm661 = vcmask 130048
        %662 = vst.msk [vmem:[%s153] sm:$0xff] %vm661, %v653
        %663 = vst.msk [vmem:[%s153 + $0x8] sm:$0xff] %vm661, %v654
        %664 = vst.msk [vmem:[%s153 + $0x10] sm:$0xff] %vm661, %v655
        %665 = vst.msk [vmem:[%s153 + $0x18] sm:$0xff] %vm661, %v656
        %666 = vst.msk [vmem:[%s153 + $0x20] sm:$0xff] %vm661, %v657
        %667 = vst.msk [vmem:[%s153 + $0x28] sm:$0xff] %vm661, %v658
        %668 = vst.msk [vmem:[%s153 + $0x30] sm:$0xff] %vm661, %v659
        %669 = vst.msk [vmem:[%s153 + $0x38] sm:$0xff] %vm661, %v660
        %s670 = sand.u32 %s68, 1
        %s671 = scalar_lea.sflag [#allocation4], %s670
        %s672 = sand.u32 %s68, 1
        %s673 = smul.addr %s672, 64
        %s674 = scalar_lea.vmem [#allocation5], %s673
        // Predicated region
        $region29: #{sobelxy.1} parent=23 // pred_check
          %p675 = pneg %p78
        $region30: #{sobelxy.1} parent=23 // pred_check_branch
          %677 = sbr.rel (%p675) target = $region32
        $region31: #{sobelxy.1} parent=23 // pred_region
          %s678 = smul.u32 4, %s23
          %s680 = ssub.s32 1024, 1024
          %681 = vsyncadd %s671, %s680
          %s682 = smul.addr %s678, 2
          %s683 = smul.addr %s22, 8
          %s684 = sadd.s32 %s682, %s683
          %s685 = smul.addr %s684, 128
          %s686 = scalar_lea.hbm %s1, %s685
          %s687 = sshll.u32 %s674, 4
          %s688 = int_to_ptr.vmem [resolvable:$true] %s687
          %693 = dma.vmem_to_hbm [thread:$0]  %s688, 1024, %s686, %s671, 128, 128, 8
        $region32: #{sobelxy.1} parent=23 // pred_fallthru
          _
      $region24: #{sobelxy.1} parent=5 // pred_fallthru
        _
      %p694 = scmp.le.s32.totalorder 2, %s13
      // Predicated region
      $region33: #{sobelxy.1} parent=5 // pred_check
        %p695 = pneg %p694
      $region34: #{sobelxy.1} parent=5 // pred_check_branch
        %697 = sbr.rel (%p695) target = $region36
      $region35: #{sobelxy.1} parent=5 // pred_region
        %s698 = ssub.s32 %s13, 2
        // Predicated region
        $region37: #{sobelxy.1} parent=35 // pred_check
          %p699 = pneg %p84
        $region38: #{sobelxy.1} parent=35 // pred_check_branch
          %701 = sbr.rel (%p699) target = $region40
        $region39: #{sobelxy.1} parent=35 // pred_region
          %s702 = sand.u32 %s69, 1
          %s703 = scalar_lea.sflag [#allocation4], %s702
          %s704 = sand.u32 %s69, 1
          %s705 = smul.addr %s704, 64
          %s706 = scalar_lea.vmem [#allocation5], %s705
          %707 = dma.done %s703, 1024
        $region40: #{sobelxy.1} parent=35 // pred_fallthru
          _
      $region36: #{sobelxy.1} parent=5 // pred_fallthru
        _
    $region6: #{sobelxy.1} parent=1 // loop_footer
      %s17 = sadd.s32 1, %s13
    $region7: #{sobelxy.1} parent=1 // loop_footer_branch
      %12 = sbr.rel target = $region3
    $region8: #{sobelxy.1} parent=1 // loop_exit
      _
    %708 = vsyncpa [#allocation3], 1
    %s709 = scalar_lea.sflag [#allocation3], 1
    %710 = vsyncpa %s709, 1
    %711 = vsyncpa [#allocation4], 1
    %s712 = scalar_lea.sflag [#allocation4], 1
    %713 = vsyncpa %s712, 1

</llo_original>
